<compile_context>
chip_gen: v5e
topology: v5e:2x2
jax: 0.10.0
libtpu: 0.0.40
codegen_flags: <defaults>
</compile_context>

<pallas_src>
import math
from functools import partial

import jax
import jax.numpy as jnp
from jax import lax
from jax.experimental import pallas as pl
from jax.experimental.pallas import tpu as pltpu


def _fcm_kernel(pred_ref, truth_ref, out_ref, acc_ref, *,
                fuzzy_factor, n_valid, tile_n, blocks_per_part):
    """One grid step processes a (B, C, tile_n) slab of predictions.

    acc_ref is a (B, C, tile_n) f32 VMEM accumulator, zeroed at the start of
    each partition and reduced to a scalar only on the partition's last step.
    out_ref is a (1, 1) SMEM scalar holding that partition's partial sum.
    """
    p = pl.program_id(0)
    j = pl.program_id(1)

    @pl.when(j == 0)
    def _():
        acc_ref[...] = jnp.zeros_like(acc_ref)

    pred = pred_ref[...].astype(jnp.float32)       # (B, C, tn)
    truth = truth_ref[...]                         # (B, 1, tn) int32 labels
    shape = pred.shape

    # membership ** fuzzy_factor; keep integer exponents on the VPU.
    if fuzzy_factor == 2:
        mem = pred * pred
    elif float(fuzzy_factor) == int(fuzzy_factor):
        mem = pred ** int(fuzzy_factor)
    else:
        # general pow -> EUP exp/log; NaN for negative preds (same as torch.pow)
        mem = pred ** float(fuzzy_factor)

    # one-hot labels: (label - 1)^2 == 1 - onehot == (truth != cluster_id)
    clus = lax.broadcasted_iota(jnp.int32, shape, 1)
    not_onehot = (truth != clus).astype(jnp.float32)

    # Mask lanes past the true (unpadded) N. Applied AFTER the multiply so
    # garbage reads in the final partial block can never poison the sum.
    start = (p * blocks_per_part + j) * tile_n
    lane = lax.broadcasted_iota(jnp.int32, shape, 2)
    valid = lane < (n_valid - start)
    acc_ref[...] += jnp.where(valid, mem * not_onehot, 0.0)

    @pl.when(j == pl.num_programs(1) - 1)
    def _():
        out_ref[0, 0] = jnp.sum(acc_ref[...])


def _choose_tile_n(B, C, n, pred_itemsize, vmem_budget_bytes, max_tile_n=8192):
    """Largest multiple-of-128 tile along N that fits the VMEM budget."""
    c_pad = -(-C // 8) * 8  # sublane padding (conservative, f32-equivalent)
    # 2x double-buffered pred + truth input blocks, plus resident f32 scratch.
    bytes_per_lane = (2 * (B * c_pad * max(int(pred_itemsize), 4) + B * 8 * 4)
                      + B * c_pad * 4)
    tile = vmem_budget_bytes // bytes_per_lane
    tile = min(tile, max_tile_n, -(-n // 128) * 128)
    tile = max(128, (tile // 128) * 128)
    return int(tile), int(bytes_per_lane)


def fcm_label_loss(y_pred, y_true, fuzzy_factor=2, one_hot=True,
                   tile_n=None, num_partitions=2,
                   vmem_budget_bytes=36 * 1024 * 1024):
    """JAX/Pallas equivalent of FCM_label.forward (one_hot=True path)."""
    if not one_hot:
        # TODO(synk): one_hot=False path (pre-one-hot / soft truth) not implemented.
        raise NotImplementedError("one_hot=False path not implemented")

    B, C = int(y_pred.shape[0]), int(y_pred.shape[1])
    spatial = y_pred.shape[2:]
    assert len(spatial) in (2, 3), "Supports only 3D or 2D!"
    N = math.prod(int(s) for s in spatial)

    # Free metadata reshapes only: no pad, no dtype cast of the big pred tensor.
    pred = y_pred.reshape(B, C, N)
    truth = y_true.reshape(B, 1, N)
    if truth.dtype != jnp.int32:
        truth = truth.astype(jnp.int32)

    itemsize = jnp.dtype(pred.dtype).itemsize
    auto_tile, bytes_per_lane = _choose_tile_n(B, C, N, itemsize, vmem_budget_bytes)
    if tile_n is None:
        tile_n = auto_tile
    else:
        tile_n = max(128, (int(tile_n) // 128) * 128)

    num_blocks = -(-N // tile_n)
    parts = max(1, min(int(num_partitions), num_blocks))
    blocks_per_part = -(-num_blocks // parts)

    def block_idx(p, j):
        # Clamp so an (empty, fully-masked) trailing block never indexes OOB.
        return jnp.minimum(p * blocks_per_part + j, num_blocks - 1)

    kernel = partial(
        _fcm_kernel,
        fuzzy_factor=fuzzy_factor,
        n_valid=N,
        tile_n=tile_n,
        blocks_per_part=blocks_per_part,
    )

    # Working-set-derived VMEM limit, capped at 48 MiB (safe on v7x's 64 MiB).
    vmem_limit = int(min(48 * 1024 * 1024,
                         bytes_per_lane * tile_n + 16 * 1024 * 1024))

    is_int_pow = float(fuzzy_factor) == int(fuzzy_factor)
    cost = pl.CostEstimate(
        flops=4 * B * C * N,
        transcendentals=0 if is_int_pow else 2 * B * C * N,
        bytes_accessed=pred.size * int(itemsize) + truth.size * 4 + parts * 4,
    )

    partials = pl.pallas_call(
        kernel,
        out_shape=jax.ShapeDtypeStruct((parts, 1), jnp.float32),
        grid_spec=pltpu.PrefetchScalarGridSpec(
            num_scalar_prefetch=0,
            grid=(parts, blocks_per_part),
            in_specs=[
                pl.BlockSpec((B, C, tile_n), lambda p, j: (0, 0, block_idx(p, j))),
                pl.BlockSpec((B, 1, tile_n), lambda p, j: (0, 0, block_idx(p, j))),
            ],
            out_specs=pl.BlockSpec((1, 1), lambda p, j: (p, 0),
                                   memory_space=pltpu.SMEM),
            scratch_shapes=[pltpu.VMEM((B, C, tile_n), jnp.float32)],
        ),
        compiler_params=pltpu.CompilerParams(
            dimension_semantics=("parallel", "arbitrary"),
            vmem_limit_bytes=vmem_limit,
        ),
        cost_estimate=cost,
    )(pred, truth)

    # mean(J_1 / num_clus) over (B, N)  ==  sum / (B * N * C)
    return jnp.sum(partials) / jnp.float32(B * N * C)


if __name__ == "__main__":
    key = jax.random.PRNGKey(0)
    k1, k2 = jax.random.split(key)

    # Small 3D shapes consistent with the module's (B, C, W, H, L) contract.
    B, C, W, H, L = 2, 4, 8, 8, 8
    logits = jax.random.normal(k1, (B, C, W, H, L), dtype=jnp.float32)
    y_pred = jax.nn.softmax(logits, axis=1)                       # softmax already applied
    y_true = jax.random.randint(k2, (B, 1, W, H, L), 0, C, dtype=jnp.int32)

    loss = fcm_label_loss(y_pred, y_true, fuzzy_factor=2, one_hot=True)
    loss = jax.block_until_ready(loss)

    # Plain-JAX reference of the exact PyTorch math.
    pred_ref = y_pred.reshape(B, C, -1)
    onehot = jax.nn.one_hot(y_true.reshape(B, -1), C, axis=1)     # (B, C, N)
    j1 = jnp.sum((pred_ref ** 2) * (onehot - 1.0) ** 2, axis=1)   # (B, N)
    ref = jnp.mean(j1 / C)
    assert jnp.allclose(loss, ref, rtol=1e-5, atol=1e-6), (loss, ref)

    print("KERNEL_OK")
</pallas_src>

<mosaic_0001>
module attributes {stable_mosaic.version = 11 : i64} {
  func.func @_fcm_kernel(%arg0: i32, %arg1: i32, %arg2: memref<2x4x512xf32, #tpu.memory_space<vmem>>, %arg3: memref<2x1x512xi32, #tpu.memory_space<vmem>>, %arg4: memref<1x1xf32, #tpu.memory_space<smem>>, %arg5: memref<2x4x512xf32, #tpu.memory_space<vmem>>) attributes {dimension_semantics = [#tpu.dimension_semantics<parallel>, #tpu.dimension_semantics<arbitrary>], iteration_bounds = array<i64: 1, 1>, scalar_prefetch = 0 : i64, scratch_operands = 1 : i64, tpu.core_type = #tpu.core_type<tc>, window_params = [{transform_indices = @transform_0, window_bounds = array<i64: 2, 4, 512>}, {transform_indices = @transform_1, window_bounds = array<i64: 2, 1, 512>}, {transform_indices = @transform_2, window_bounds = array<i64: 1, 1>}]} {
    %c0_i32 = arith.constant 0 : i32
    %0 = arith.cmpi eq, %arg1, %c0_i32 : i32
    %1 = arith.extui %0 : i1 to i32
    %c0_i32_0 = arith.constant 0 : i32
    %2 = arith.cmpi ne, %1, %c0_i32_0 : i32
    scf.if %2 {
      %cst_15 = arith.constant 0.000000e+00 : f32
      %27 = vector.broadcast %cst_15 : f32 to vector<2x4x512xf32>
      %c0_16 = arith.constant 0 : index
      %c0_17 = arith.constant 0 : index
      %c0_18 = arith.constant 0 : index
      %28 = vector.load %arg5[%c0_16, %c0_17, %c0_18] : memref<2x4x512xf32, #tpu.memory_space<vmem>>, vector<2x4x512xf32>
      tpu.vector_store %arg5[%c0_16, %c0_17, %c0_18], %27 {strides = array<i32>} : memref<2x4x512xf32, #tpu.memory_space<vmem>>, vector<2x4x512xf32>,
    } else {
    }
    %c0 = arith.constant 0 : index
    %c0_1 = arith.constant 0 : index
    %c0_2 = arith.constant 0 : index
    %3 = vector.load %arg2[%c0, %c0_1, %c0_2] : memref<2x4x512xf32, #tpu.memory_space<vmem>>, vector<2x4x512xf32>
    %c0_3 = arith.constant 0 : index
    %c0_4 = arith.constant 0 : index
    %c0_5 = arith.constant 0 : index
    %4 = vector.load %arg3[%c0_3, %c0_4, %c0_5] : memref<2x1x512xi32, #tpu.memory_space<vmem>>, vector<2x1x512xi32>
    %5 = arith.mulf %3, %3 : vector<2x4x512xf32>
    %6 = tpu.iota {dimensions = array<i32: 1>} : vector<2x4x512xi32>
    %7 = vector.broadcast %4 : vector<2x1x512xi32> to vector<2x4x512xi32>
    %8 = arith.cmpi ne, %7, %6 : vector<2x4x512xi32>
    %9 = arith.extui %8 : vector<2x4x512xi1> to vector<2x4x512xi32>
    %10 = arith.sitofp %9 : vector<2x4x512xi32> to vector<2x4x512xf32>
    %c1_i32 = arith.constant 1 : i32
    %11 = arith.muli %arg0, %c1_i32 : i32
    %12 = arith.addi %11, %arg1 : i32
    %c512_i32 = arith.constant 512 : i32
    %13 = arith.muli %12, %c512_i32 : i32
    %14 = tpu.iota {dimensions = array<i32: 2>} : vector<2x4x512xi32>
    %c512_i32_6 = arith.constant 512 : i32
    %15 = arith.subi %c512_i32_6, %13 : i32
    %16 = vector.broadcast %15 : i32 to vector<2x4x512xi32>
    %17 = arith.cmpi slt, %14, %16 : vector<2x4x512xi32>
    %c0_7 = arith.constant 0 : index
    %c0_8 = arith.constant 0 : index
    %c0_9 = arith.constant 0 : index
    %18 = vector.load %arg5[%c0_7, %c0_8, %c0_9] : memref<2x4x512xf32, #tpu.memory_space<vmem>>, vector<2x4x512xf32>
    %19 = arith.mulf %5, %10 : vector<2x4x512xf32>
    %cst = arith.constant 0.000000e+00 : f32
    %20 = vector.broadcast %cst : f32 to vector<2x4x512xf32>
    %21 = arith.select %17, %19, %20 : vector<2x4x512xi1>, vector<2x4x512xf32>
    %22 = arith.addf %18, %21 : vector<2x4x512xf32>
    %c0_10 = arith.constant 0 : index
    %c0_11 = arith.constant 0 : index
    %c0_12 = arith.constant 0 : index
    %23 = vector.load %arg5[%c0_10, %c0_11, %c0_12] : memref<2x4x512xf32, #tpu.memory_space<vmem>>, vector<2x4x512xf32>
    tpu.vector_store %arg5[%c0_10, %c0_11, %c0_12], %22 {strides = array<i32>} : memref<2x4x512xf32, #tpu.memory_space<vmem>>, vector<2x4x512xf32>,
    %c0_i32_13 = arith.constant 0 : i32
    %24 = arith.cmpi eq, %arg1, %c0_i32_13 : i32
    %25 = arith.extui %24 : i1 to i32
    %c0_i32_14 = arith.constant 0 : i32
    %26 = arith.cmpi ne, %25, %c0_i32_14 : i32
    scf.if %26 {
      %c0_15 = arith.constant 0 : index
      %c0_16 = arith.constant 0 : index
      %c0_17 = arith.constant 0 : index
      %27 = vector.load %arg5[%c0_15, %c0_16, %c0_17] : memref<2x4x512xf32, #tpu.memory_space<vmem>>, vector<2x4x512xf32>
      %28 = vector.shape_cast %27 : vector<2x4x512xf32> to vector<1x2x4x512xf32>
      %cst_18 = arith.constant dense<0.000000e+00> : vector<1xf32>
      %29 = vector.multi_reduction <add>, %28, %cst_18 [1, 2, 3] : vector<1x2x4x512xf32> to vector<1xf32>
      %30 = vector.shape_cast %29 : vector<1xf32> to vector<1x1x1x1xf32>
      %31 = vector.extract %30[0, 0, 0, 0] : f32 from vector<1x1x1x1xf32>
      %c0_19 = arith.constant 0 : index
      %c0_20 = arith.constant 0 : index
      %32 = memref.load %arg4[%c0_19, %c0_20] : memref<1x1xf32, #tpu.memory_space<smem>>
      memref.store %31, %arg4[%c0_19, %c0_20] : memref<1x1xf32, #tpu.memory_space<smem>>
    } else {
    }
    return
  }
  func.func @transform_0(%arg0: i32, %arg1: i32) -> (i32, i32, i32) {
    %c1_i32 = arith.constant 1 : i32
    %0 = arith.muli %arg0, %c1_i32 : i32
    %1 = arith.addi %0, %arg1 : i32
    %c0_i32 = arith.constant 0 : i32
    %2 = arith.minsi %1, %c0_i32 : i32
    %c0_i32_0 = arith.constant 0 : i32
    %c0_i32_1 = arith.constant 0 : i32
    %c0_i32_2 = arith.constant 0 : i32
    return %c0_i32_0, %c0_i32_1, %2 : i32, i32, i32
  }
  func.func @transform_1(%arg0: i32, %arg1: i32) -> (i32, i32, i32) {
    %c1_i32 = arith.constant 1 : i32
    %0 = arith.muli %arg0, %c1_i32 : i32
    %1 = arith.addi %0, %arg1 : i32
    %c0_i32 = arith.constant 0 : i32
    %2 = arith.minsi %1, %c0_i32 : i32
    %c0_i32_0 = arith.constant 0 : i32
    %c0_i32_1 = arith.constant 0 : i32
    %c0_i32_2 = arith.constant 0 : i32
    return %c0_i32_0, %c0_i32_1, %2 : i32, i32, i32
  }
  func.func @transform_2(%arg0: i32, %arg1: i32) -> (i32, i32) {
    %c0_i32 = arith.constant 0 : i32
    %c0_i32_0 = arith.constant 0 : i32
    return %arg0, %c0_i32 : i32, i32
  }
}

</mosaic_0001>

<llo_original>
// kernel: tpu_custom_call.1
$region0: #{tpu_custom_call.1}
  #allocation0 [shape = 'u32[]', space=smem, size = 0x4, offset = 0x4, fixed_abs, tag = 'smem constant byte address 0x4 - core index']
  #allocation1 [shape = 'u32[72,128]{1,0:T(1,128)}', space=vmem, size = 0x9000, scoped, tag = 'internal scratch']
  #allocation2 [shape = 'f32[2,4,512]{2,1,0:T(4,128)}', space=vmem, size = 0x4000, scoped, tag = 'scratch operand']
  %s0 = inlined_call_operand.hbm [shape: f32[2,4,512], index: 0, kind: input, shape index: {}]
  %s1 = inlined_call_operand.hbm [shape: s32[2,1,512], index: 1, kind: input, shape index: {}]
  %s2 = inlined_call_operand.hbm [shape: f32[1,1], index: 2, kind: output, shape index: {}]
  %s3 = sld [smem:[#allocation0]]
  $region34: #{tpu_custom_call.1} parent=0
    _
  %s5 = ssub.s32 1, %s3
  %s6 = scalar_select 0, %s5, %s3
  $region1: #{tpu_custom_call.1} parent=0
    #allocation3 [shape = 'u8[16384]{0}', space=vmem, size = 0x4000, scoped, tag = 'input window, operand 0, single buffered']
    #allocation4 [shape = 's32[1]{0}', space=sflag, size = 0x4, scoped, tag = 'scoped memory for tpu_custom_call.1']
    #allocation5 [shape = 's32[1]{0}', space=sflag, size = 0x4, scoped, tag = 'scoped memory for tpu_custom_call.1']
    #allocation6 [shape = 'u8[4096]{0}', space=vmem, size = 0x1000, scoped, tag = 'input window, operand 1, single buffered']
    #allocation7 [shape = 's32[1]{0}', space=sflag, size = 0x4, scoped, tag = 'scoped memory for tpu_custom_call.1']
    #allocation8 [shape = 'u8[512]{0}', space=smem, size = 0x200, scoped, tag = 'output window, operand 0, single buffered']
    %7 = vsyncpa [#allocation4], 0
    %8 = vsyncpa [#allocation7], 0
    %9 = vsyncpa [#allocation5], 0
    // Predicated region
    $region2: #{tpu_custom_call.1} parent=1 // pred_check
      _
    $region3: #{tpu_custom_call.1} parent=1 // pred_check_branch
      %11 = sbr.rel (0) target = $region5
    $region4: #{tpu_custom_call.1} parent=1 // pred_region
      %s12 = sadd.s32 0, 0
      %p13 = scmp.lt.s32.totalorder %s12, 0
      %s14 = scalar_select %p13, %s12, 0
      %s15 = smul.u32 4, %s14
      %17 = vsyncadd [#allocation4], 0
      %s18 = smul.addr %s15, 4
      %s19 = scalar_lea.hbm %s0, %s18
      %s20 = sshll.u32 %s19, 4
      %s21 = int_to_ptr.hbm [resolvable:$true] %s20
      %s22 = sshll.u32 [#allocation3], 4
      %s23 = int_to_ptr.vmem [resolvable:$true] %s22
      %28 = dma.hbm_to_vmem [thread:$0]  %s21, 512, %s23, [#allocation4], 256, 256, 16
    $region5: #{tpu_custom_call.1} parent=1 // pred_fallthru
      _
    // Predicated region
    $region6: #{tpu_custom_call.1} parent=1 // pred_check
      _
    $region7: #{tpu_custom_call.1} parent=1 // pred_check_branch
      %30 = sbr.rel (0) target = $region9
    $region8: #{tpu_custom_call.1} parent=1 // pred_region
      %s31 = sadd.s32 0, 0
      %p32 = scmp.lt.s32.totalorder %s31, 0
      %s33 = scalar_select %p32, %s31, 0
      %s34 = smul.u32 4, %s33
      %36 = vsyncadd [#allocation7], 0
      %s37 = scalar_lea.hbm %s1, %s34
      %s38 = sshll.u32 %s37, 4
      %s39 = int_to_ptr.hbm [resolvable:$true] %s38
      %s40 = sshll.u32 [#allocation6], 4
      %s41 = int_to_ptr.vmem [resolvable:$true] %s40
      %46 = dma.hbm_to_vmem [thread:$0]  %s39, 128, %s41, [#allocation7], 64, 64, 4
    $region9: #{tpu_custom_call.1} parent=1 // pred_fallthru
      _
    // Predicated region
    $region10: #{tpu_custom_call.1} parent=1 // pred_check
      _
    $region11: #{tpu_custom_call.1} parent=1 // pred_check_branch
      %48 = sbr.rel (0) target = $region13
    $region12: #{tpu_custom_call.1} parent=1 // pred_region
      %50 = dma.done [#allocation4], 512
    $region13: #{tpu_custom_call.1} parent=1 // pred_fallthru
      _
    // Predicated region
    $region14: #{tpu_custom_call.1} parent=1 // pred_check
      _
    $region15: #{tpu_custom_call.1} parent=1 // pred_check_branch
      %52 = sbr.rel (0) target = $region17
    $region16: #{tpu_custom_call.1} parent=1 // pred_region
      %54 = dma.done [#allocation7], 128
    $region17: #{tpu_custom_call.1} parent=1 // pred_fallthru
      _
    %s55 = sadd.s32 0, 0
    %p56 = scmp.lt.s32.totalorder %s55, 0
    %s57 = scalar_select %p56, %s55, 0
    %s58 = smul.u32 4, %s57
    %s59 = sadd.s32 0, 0
    %p60 = scmp.lt.s32.totalorder %s59, 0
    %s61 = scalar_select %p60, %s59, 0
    %s62 = smul.u32 4, %s61
    %p63 = scmp.eq.s32.totalorder 0, 0
    // Predicated region
    $region18: #{tpu_custom_call.1} parent=1 // pred_check
      %p64 = pneg %p63
    $region19: #{tpu_custom_call.1} parent=1 // pred_check_branch
      %66 = sbr.rel (%p64) target = $region21
    $region20: #{tpu_custom_call.1} parent=1 // pred_region
      %67 = vst [vmem:[#allocation2] sm:$0xff] 0.0
      %68 = vst [vmem:[#allocation2 + $0x8] sm:$0xff] 0.0
      %69 = vst [vmem:[#allocation2 + $0x10] sm:$0xff] 0.0
      %70 = vst [vmem:[#allocation2 + $0x18] sm:$0xff] 0.0
    $region21: #{tpu_custom_call.1} parent=1 // pred_fallthru
      _
    %v71 = vld [vmem:[#allocation3] sm:$0xff]
    %v72 = vld [vmem:[#allocation3 + $0x8] sm:$0xff]
    %v73 = vld [vmem:[#allocation3 + $0x10] sm:$0xff]
    %v74 = vld [vmem:[#allocation3 + $0x18] sm:$0xff]
    %v75 = vld [vmem:[#allocation6] sm:$0xf]
    %v76 = vld [vmem:[#allocation6 + $0x4] sm:$0xf]
    %v77 = vmul.f32 %v71, %v71
    %v78 = vmul.f32 %v72, %v72
    %v79 = vmul.f32 %v73, %v73
    %v80 = vmul.f32 %v74, %v74
    %v81 = vlaneseq
    %v82 = vshrl.u32 %v81, 7
    %v83 = vperm.slane %v75, 0
    %v84 = vperm.slane %v75, 1
    %v85 = vperm.slane %v75, 2
    %v86 = vperm.slane %v75, 3
    %v87 = vperm.slane %v76, 0
    %v88 = vperm.slane %v76, 1
    %v89 = vperm.slane %v76, 2
    %v90 = vperm.slane %v76, 3
    %vm91 = vcmp.ne.s32.totalorder %v83, %v82
    %vm92 = vcmp.ne.s32.totalorder %v84, %v82
    %vm93 = vcmp.ne.s32.totalorder %v85, %v82
    %vm94 = vcmp.ne.s32.totalorder %v86, %v82
    %vm95 = vcmp.ne.s32.totalorder %v87, %v82
    %vm96 = vcmp.ne.s32.totalorder %v88, %v82
    %vm97 = vcmp.ne.s32.totalorder %v89, %v82
    %vm98 = vcmp.ne.s32.totalorder %v90, %v82
    %v99 = vsel %vm91, 1, 0
    %v100 = vsel %vm92, 1, 0
    %v101 = vsel %vm93, 1, 0
    %v102 = vsel %vm94, 1, 0
    %v103 = vsel %vm95, 1, 0
    %v104 = vsel %vm96, 1, 0
    %v105 = vsel %vm97, 1, 0
    %v106 = vsel %vm98, 1, 0
    %v107 = vcvt.s32.f32 %v99
    %v108 = vcvt.s32.f32 %v100
    %v109 = vcvt.s32.f32 %v101
    %v110 = vcvt.s32.f32 %v102
    %v111 = vcvt.s32.f32 %v103
    %v112 = vcvt.s32.f32 %v104
    %v113 = vcvt.s32.f32 %v105
    %v114 = vcvt.s32.f32 %v106
    %s115 = sadd.s32 0, 0
    %s116 = smul.u32 %s115, 512
    %v117 = vlaneseq
    %v118 = vand.u32 %v117, 127
    %v119 = vadd.s32 %v118, 128
    %v120 = vadd.s32 %v118, 256
    %v121 = vadd.s32 %v118, 384
    %s122 = ssub.s32 512, %s116
    %v123 = vstv %s122
    %vm124 = vcmp.lt.s32.totalorder %v118, %v123
    %vm125 = vcmp.lt.s32.totalorder %v119, %v123
    %vm126 = vcmp.lt.s32.totalorder %v120, %v123
    %vm127 = vcmp.lt.s32.totalorder %v121, %v123
    %v128 = vld [vmem:[#allocation2] sm:$0xff]
    %v129 = vld [vmem:[#allocation2 + $0x8] sm:$0xff]
    %v130 = vld [vmem:[#allocation2 + $0x10] sm:$0xff]
    %v131 = vld [vmem:[#allocation2 + $0x18] sm:$0xff]
    %v140 = vrot.slane %v108, 4
    %v141 = vrot.slane %v110, 4
    %v142 = vrot.slane %v112, 4
    %v143 = vrot.slane %v114, 4
    %vm144 = vcmask 1043456
    %v145 = vsel %vm144, %v107, %v140
    %v146 = vsel %vm144, %v109, %v141
    %v147 = vsel %vm144, %v111, %v142
    %v148 = vsel %vm144, %v113, %v143
    %v153 = vmul.f32 %v77, %v145
    %v154 = vmul.f32 %v78, %v146
    %v155 = vmul.f32 %v79, %v147
    %v156 = vmul.f32 %v80, %v148
    %161 = vst [vmem:[#allocation1] ss:$2 sm:$0xff] %v153
    %s162 = scalar_lea.vmem [#allocation1], 16
    %163 = vst [vmem:[%s162] ss:$2 sm:$0xff] %v154
    %v164 = vld.sshfl [vmem:[#allocation1] sm:$0xff pattern:$0x75316420]
    %v165 = vld.sshfl [vmem:[#allocation1 + $0x8] sm:$0xff pattern:$0x75316420]
    %v166 = vld.sshfl [vmem:[#allocation1 + $0x10] sm:$0xff pattern:$0x75316420]
    %v167 = vld.sshfl [vmem:[#allocation1 + $0x18] sm:$0xff pattern:$0x75316420]
    %s168 = scalar_lea.vmem [#allocation1], 32
    %169 = vst [vmem:[%s168] ss:$2 sm:$0xff] %v155
    %s170 = scalar_lea.vmem [#allocation1], 48
    %171 = vst [vmem:[%s170] ss:$2 sm:$0xff] %v156
    %v172 = vld.sshfl [vmem:[#allocation1 + $0x20] sm:$0xff pattern:$0x75316420]
    %v173 = vld.sshfl [vmem:[#allocation1 + $0x28] sm:$0xff pattern:$0x75316420]
    %v174 = vld.sshfl [vmem:[#allocation1 + $0x30] sm:$0xff pattern:$0x75316420]
    %v175 = vld.sshfl [vmem:[#allocation1 + $0x38] sm:$0xff pattern:$0x75316420]
    %v184 = vsel %vm124, %v164, 0.0
    %v185 = vsel %vm125, %v165, 0.0
    %v186 = vsel %vm126, %v166, 0.0
    %v187 = vsel %vm127, %v167, 0.0
    %v188 = vsel %vm124, %v172, 0.0
    %v189 = vsel %vm125, %v173, 0.0
    %v190 = vsel %vm126, %v174, 0.0
    %v191 = vsel %vm127, %v175, 0.0
    %v200 = vrot.slane %v185, 4
    %v201 = vrot.slane %v187, 4
    %v202 = vrot.slane %v189, 4
    %v203 = vrot.slane %v191, 4
    %v204 = vsel %vm144, %v184, %v200
    %v205 = vsel %vm144, %v186, %v201
    %v206 = vsel %vm144, %v188, %v202
    %v207 = vsel %vm144, %v190, %v203
    %v212 = vadd.f32 %v128, %v204
    %v213 = vadd.f32 %v129, %v205
    %v214 = vadd.f32 %v130, %v206
    %v215 = vadd.f32 %v131, %v207
    %216 = vst [vmem:[#allocation2] sm:$0xff] %v212
    %217 = vst [vmem:[#allocation2 + $0x8] sm:$0xff] %v213
    %218 = vst [vmem:[#allocation2 + $0x10] sm:$0xff] %v214
    %219 = vst [vmem:[#allocation2 + $0x18] sm:$0xff] %v215
    // Predicated region
    $region22: #{tpu_custom_call.1} parent=1 // pred_check
      %p220 = pneg %p63
    $region23: #{tpu_custom_call.1} parent=1 // pred_check_branch
      %222 = sbr.rel (%p220) target = $region25
    $region24: #{tpu_custom_call.1} parent=1 // pred_region
      %v223 = vld [vmem:[#allocation2] sm:$0xff]
      %v224 = vld [vmem:[#allocation2 + $0x8] sm:$0xff]
      %v225 = vld [vmem:[#allocation2 + $0x10] sm:$0xff]
      %v226 = vld [vmem:[#allocation2 + $0x18] sm:$0xff]
      %231 = vst [vmem:[#allocation1] ss:$2 sm:$0xff] %v223
      %s232 = scalar_lea.vmem [#allocation1], 16
      %233 = vst [vmem:[%s232] ss:$2 sm:$0xff] %v224
      %v234 = vld.sshfl [vmem:[#allocation1] sm:$0xff pattern:$0x75316420]
      %v235 = vld.sshfl [vmem:[#allocation1 + $0x8] sm:$0xff pattern:$0x75316420]
      %v236 = vld.sshfl [vmem:[#allocation1 + $0x10] sm:$0xff pattern:$0x75316420]
      %v237 = vld.sshfl [vmem:[#allocation1 + $0x18] sm:$0xff pattern:$0x75316420]
      %s238 = scalar_lea.vmem [#allocation1], 32
      %239 = vst [vmem:[%s238] ss:$2 sm:$0xff] %v225
      %s240 = scalar_lea.vmem [#allocation1], 48
      %241 = vst [vmem:[%s240] ss:$2 sm:$0xff] %v226
      %v242 = vld.sshfl [vmem:[#allocation1 + $0x20] sm:$0xff pattern:$0x75316420]
      %v243 = vld.sshfl [vmem:[#allocation1 + $0x28] sm:$0xff pattern:$0x75316420]
      %v244 = vld.sshfl [vmem:[#allocation1 + $0x30] sm:$0xff pattern:$0x75316420]
      %v245 = vld.sshfl [vmem:[#allocation1 + $0x38] sm:$0xff pattern:$0x75316420]
      %v254 = vsel %vm144, %v234, 0.0
      %v255 = vsel %vm144, %v235, 0.0
      %v256 = vadd.f32 %v254, %v255
      %v257 = vsel %vm144, %v236, 0.0
      %v258 = vadd.f32 %v256, %v257
      %v259 = vsel %vm144, %v237, 0.0
      %v260 = vadd.f32 %v258, %v259
      %v261 = vsel %vm144, %v242, 0.0
      %v262 = vadd.f32 %v260, %v261
      %v263 = vsel %vm144, %v243, 0.0
      %v264 = vadd.f32 %v262, %v263
      %v265 = vsel %vm144, %v244, 0.0
      %v266 = vadd.f32 %v264, %v265
      %v267 = vsel %vm144, %v245, 0.0
      %v268 = vadd.f32 %v266, %v267
      %269 = vadd.xlane.f32.xlu0 %v268
      %v270 = vpop.xlane.xlu0 %269
      %v271 = vrot.slane %v270, 4
      %v272 = vadd.f32 %v270, %v271
      %v273 = vrot.slane %v272, 2
      %v274 = vadd.f32 %v272, %v273
      %v275 = vrot.slane %v274, 1
      %v276 = vadd.f32 %v274, %v275
      %s277 = vtos %v276
      %s278 = scalar_lea.smem [#allocation8], 0
      %279 = sst [smem:[%s278]] %s277
    $region25: #{tpu_custom_call.1} parent=1 // pred_fallthru
      _
    // Predicated region
    $region26: #{tpu_custom_call.1} parent=1 // pred_check
      _
    $region27: #{tpu_custom_call.1} parent=1 // pred_check_branch
      %281 = sbr.rel (0) target = $region29
    $region28: #{tpu_custom_call.1} parent=1 // pred_region
      %283 = vsyncadd [#allocation5], 0
      %s285 = sshll.u32 %s2, 4
      %s286 = int_to_ptr.hbm [resolvable:$true] %s285
      %288 = dma.smem_to_hbm [#allocation8], 16, %s286, [#allocation5]
    $region29: #{tpu_custom_call.1} parent=1 // pred_fallthru
      _
    // Predicated region
    $region30: #{tpu_custom_call.1} parent=1 // pred_check
      _
    $region31: #{tpu_custom_call.1} parent=1 // pred_check_branch
      %290 = sbr.rel (0) target = $region33
    $region32: #{tpu_custom_call.1} parent=1 // pred_region
      %292 = dma.done [#allocation5], 16
    $region33: #{tpu_custom_call.1} parent=1 // pred_fallthru
      _
    %293 = sfence
    %294 = vsyncpa [#allocation4], 1
    %295 = vsyncpa [#allocation7], 1
    %296 = vsyncpa [#allocation5], 1

</llo_original>
